<compile_context>
chip_gen: v6e
topology: v6e:2x2x1
jax: 0.10.0
libtpu: 0.0.40
codegen_flags: <defaults>
</compile_context>

<pallas_src>
import functools

import numpy as np
import jax
import jax.numpy as jnp
from jax import lax
from jax.experimental import pallas as pl
from jax.experimental.pallas import tpu as pltpu

N_FEATURES = 3
N_WIRES = 3606
LEAKY_SLOPE = 0.2
MXU_DEPTH = 256          # target contraction depth for the stacked conv matmul


# ----------------------------------------------------------------------------
# pltpu.roll convention probe (jnp.roll semantics expected).  Run once in
# __main__ BEFORE any jit; the boolean is passed down explicitly so the
# convention is baked in as a compile-time constant.
# ----------------------------------------------------------------------------
def detect_roll_convention():
    def probe(x_ref, o_ref):
        o_ref[...] = pltpu.roll(x_ref[...], 3, axis=1)

    x = jnp.arange(8 * 128, dtype=jnp.float32).reshape(8, 128)
    y = pl.pallas_call(
        probe, out_shape=jax.ShapeDtypeStruct((8, 128), jnp.float32))(x)
    return bool(jnp.array_equal(y, jnp.roll(x, 3, axis=1)))


def _roll_lanes(x, shift, roll_like_jnp):
    """Circular roll along the last (lane) axis with jnp.roll semantics:
    out[..., t] = x[..., (t - shift) % L]."""
    L = x.shape[-1]
    s = shift % L
    if s == 0:
        return x
    if not roll_like_jnp:          # flip convention if the hardware op differs
        s = L - s
    return pltpu.roll(x, s, axis=x.ndim - 1)


# ----------------------------------------------------------------------------
# In-kernel circular conv layer (channels-first (C, L), stacked grouped taps)
# ----------------------------------------------------------------------------
def _conv_circ(x, wm_ref, wt_ref, b_ref, *, K, G, Cout, residual, roll_like_jnp):
    """Circular 'same' Conv1d + bias (+ residual) + LeakyReLU in (C, L) layout.

        out[co, t] = sum_{k,ci} W[co,ci,k] * x[ci, (t + k - pad) % L]

    Taps 0..K-2 are tiled exactly by Kg = (K-1)/G groups of G taps and
    contracted in ONE stacked MXU dot:
        wm_ref : (Kg*Cout, G*Cin) bf16, wm[g*Cout+co, j*Cin+ci] = W[co,ci,G*g+j]
        z      : (G*Cin, L)       bf16, z[j*Cin+ci, t] = x[ci, (t + j) % L]
        out   += sum_g roll(pg_all[g*Cout:(g+1)*Cout], pad - G*g)
    The single leftover tap k = K-1 is a tiny extra dot (no zero-padded MACs):
        wt_ref : (Cout, Cin) bf16 = W[:, :, K-1]; its contribution rolls by -pad.
    """
    roll = lambda a, s: _roll_lanes(a, s, roll_like_jnp)
    Cin, L = x.shape
    pad = (K - 1) // 2
    Kg = wm_ref.shape[0] // Cout
    assert Kg * G == K - 1 and wm_ref.shape[1] == G * Cin

    # Cast before the im2col rolls when Cin keeps bf16 sublane tiles (16 rows)
    # aligned; otherwise build the slab in f32 and cast once (avoids repacking).
    xs = x.astype(jnp.bfloat16) if Cin % 16 == 0 else x
    if G == 1:
        z = xs.astype(jnp.bfloat16)
    else:
        pieces = [xs] + [roll(xs, -j) for j in range(1, G)]
        z = jnp.concatenate(pieces, axis=0).astype(jnp.bfloat16)   # (G*Cin, L)
    xb = z[:Cin]                                                   # bf16 copy of x

    # One stacked MXU dot for all full tap groups.
    pg_all = jnp.dot(wm_ref[...], z, preferred_element_type=jnp.float32)
    acc = roll(pg_all[:Cout], pad)
    for g in range(1, Kg):                                 # unrolled, Kg <= 32
        acc = acc + roll(pg_all[g * Cout:(g + 1) * Cout], pad - G * g)
    # Leftover tap k = K-1.
    acc = acc + roll(
        jnp.dot(wt_ref[...], xb, preferred_element_type=jnp.float32), -pad)

    acc = acc + b_ref[...]                                 # (Cout, 1) broadcast
    if residual is not None:
        acc = acc + residual
    return jnp.where(acc >= 0, acc, LEAKY_SLOPE * acc)


# ----------------------------------------------------------------------------
# Fused Disc.forward kernel (everything after the hoisted 1x1 projections)
# ----------------------------------------------------------------------------
def _make_kernel(defs, roll_like_jnp):
    n_layers = len(defs)
    idx = {d["name"]: i for i, d in enumerate(defs)}

    def kernel(*refs):
        p_ref, w_ref = refs[0], refs[1]     # (1, ndf, L) f32 each (pre-projected)
        out_ref = refs[-1]                  # (1, 8, 128) f32
        pr = refs[2:-1]                     # [wm, wt, b] * 14 + [lin_w, lin_b]

        def conv(name, x, residual=None):
            i = idx[name]
            d = defs[i]
            return _conv_circ(x, pr[3 * i], pr[3 * i + 1], pr[3 * i + 2],
                              K=d["K"], G=d["G"], Cout=d["cout"],
                              residual=residual, roll_like_jnp=roll_like_jnp)

        # wire branch (convw already applied outside the kernel)
        w0 = conv("convw0", w_ref[0])
        w1 = conv("convw1", w0)
        w2 = conv("convw2", w1, residual=w0)
        w3 = conv("convw3", w2)
        w4 = conv("convw4", w3, residual=w2)

        # feature branch (convp already applied outside the kernel)
        p0 = conv("convp0", p_ref[0])
        p1 = conv("convp1", p0)
        p2 = conv("convp2", p1, residual=p0)
        p3 = conv("convp3", p2)

        # trunk: torch.cat([p, w], dim=1)  ==  channel (sublane) concat
        x = jnp.concatenate([p3, w4], axis=0)
        x1 = conv("conv1", x)
        x2 = conv("conv2", x1, residual=x)
        x3 = conv("conv3", x2)
        x4 = conv("conv4", x3, residual=x2)
        x5 = conv("conv5", x4)                             # (ndf*6, L) f32

        # lin0 on x5.flatten(1, 2): weight pre-reshaped to (C, L) to match the
        # c*L + t flatten order -> a plain f32 weighted reduce.
        wl = pr[3 * n_layers][...]                         # (C, L) f32
        bl = pr[3 * n_layers + 1][...]                     # (1, 1) f32
        tot = jnp.sum(x5 * wl, axis=1, keepdims=True)      # (C, 1)
        tot = jnp.sum(tot, axis=0, keepdims=True) + bl     # (1, 1)
        out_ref[0] = jnp.broadcast_to(tot, out_ref.shape[1:]).astype(jnp.float32)

    return kernel


def disc_forward(defs, ndf, roll_like_jnp, params, p_in, w_in):
    """p_in: (B, 3, L) f32, w_in: (B, n_wires, L) f32 (PyTorch NCL layout)."""
    B, _, L = p_in.shape

    # convw / convp (1x1, bias-free, no act) hoisted out of the Pallas kernel
    # as large-N f32 XLA matmuls: full MXU utilization for the 3606-deep
    # contraction, better numerical fidelity, and the kernel's wire input
    # shrinks to (B, ndf, L) -- no standalone bf16 cast pre-pass any more.
    w_pre = jnp.einsum("oc,bcl->bol", params["convw_w"],
                       w_in.astype(jnp.float32), precision=lax.Precision.HIGHEST)
    p_pre = jnp.einsum("oc,bcl->bol", params["convp_w"],
                       p_in.astype(jnp.float32), precision=lax.Precision.HIGHEST)

    inputs = [p_pre, w_pre]
    in_specs = [
        pl.BlockSpec((1, ndf, L), lambda b: (b, 0, 0)),
        pl.BlockSpec((1, ndf, L), lambda b: (b, 0, 0)),
    ]
    param_arrays = []
    for d in defs:
        lp = params[d["name"]]
        param_arrays += [lp["wm"], lp["wt"], lp["b"]]
    param_arrays += [params["lin0_w"], params["lin0_b"]]
    for arr in param_arrays:
        inputs.append(arr)
        # Full-array blocks with a constant index map: fetched once and reused
        # across the whole grid (total ~1 MB, double-buffering cost is noise).
        in_specs.append(pl.BlockSpec(arr.shape, lambda b, nd=arr.ndim: (0,) * nd))

    out = pl.pallas_call(
        _make_kernel(defs, roll_like_jnp),
        grid=(B,),
        in_specs=in_specs,
        out_specs=pl.BlockSpec((1, 8, 128), lambda b: (b, 0, 0)),
        out_shape=jax.ShapeDtypeStruct((B, 8, 128), jnp.float32),
        compiler_params=pltpu.CompilerParams(
            dimension_semantics=("parallel",),        # batch across TCs on v7x
            vmem_limit_bytes=32 * 1024 * 1024,        # fits v5e / v6e / v7x
        ),
    )(*inputs)
    return out[:, 0, 0]                               # == .squeeze(1)


# ----------------------------------------------------------------------------
# Layer table / parameter setup (deterministic, synthetic)
# ----------------------------------------------------------------------------
def make_layer_defs(ndf):
    raw = [
        # name      cin       cout      K
        ("convw0", ndf,      ndf * 2,  513),
        ("convw1", ndf * 2,  ndf * 2,  257),
        ("convw2", ndf * 2,  ndf * 2,  129),
        ("convw3", ndf * 2,  ndf * 2,  65),
        ("convw4", ndf * 2,  ndf * 2,  33),
        ("convp0", ndf,      ndf * 2,  513),
        ("convp1", ndf * 2,  ndf * 2,  257),
        ("convp2", ndf * 2,  ndf * 2,  129),
        ("convp3", ndf * 2,  ndf * 2,  65),
        ("conv1",  ndf * 4,  ndf * 4,  17),
        ("conv2",  ndf * 4,  ndf * 4,  17),
        ("conv3",  ndf * 4,  ndf * 4,  17),
        ("conv4",  ndf * 4,  ndf * 4,  17),
        ("conv5",  ndf * 4,  ndf * 6,  17),
    ]
    defs = []
    for name, cin, cout, k in raw:
        assert k % 2 == 1 and k > 1, "odd kernel size required for 'same' padding"
        g = max(1, min(k - 1, MXU_DEPTH // cin))   # contraction depth G*Cin <= 256
        while (k - 1) % g:                         # G must tile the K-1 full taps
            g -= 1
        defs.append(dict(name=name, cin=cin, cout=cout, K=k, G=g))
    return defs


def _spectral_normalize(w, n_iter=20):
    """Divide by the largest singular value of w.reshape(Cout, -1)."""
    co = w.shape[0]
    wm = w.reshape(co, -1).astype(np.float64)
    v = np.ones((wm.shape[1],)) / np.sqrt(wm.shape[1])
    for _ in range(n_iter):
        u = wm @ v
        u /= np.linalg.norm(u) + 1e-12
        v = wm.T @ u
        v /= np.linalg.norm(v) + 1e-12
    sigma = float(np.linalg.norm(wm @ v)) + 1e-12
    return (w / sigma).astype(np.float32)


def _split_weight(w, G):
    """(Cout, Cin, K) f32 -> (wm, wt):
       wm (Kg*Cout, G*Cin) bf16 stacked full-tap groups (taps 0..K-2, exact),
       wt (Cout, Cin)      bf16 leftover tap K-1 (handled by a tiny extra dot)."""
    cout, cin, k = w.shape
    kg = (k - 1) // G
    assert kg * G == k - 1
    wm = w[:, :, :k - 1].reshape(cout, cin, kg, G)     # tap = g*G + j
    wm = wm.transpose(2, 0, 3, 1).reshape(kg * cout, G * cin)
    wt = w[:, :, k - 1]
    return jnp.asarray(wm, jnp.bfloat16), jnp.asarray(wt, jnp.bfloat16)


def init_params(key, defs, ndf, seq_len):
    """Returns (kernel_params, raw_params); raw keeps the original f32 weights
    for the pure-JAX reference check."""
    keys = iter(jax.random.split(key, 64))
    params, raw = {}, {}

    for d in defs:
        cin, cout, k = d["cin"], d["cout"], d["K"]
        fan = cin * k
        w = np.asarray(jax.random.normal(next(keys), (cout, cin, k), jnp.float32))
        w = _spectral_normalize((w / np.sqrt(fan)).astype(np.float32))
        b = np.asarray(jax.random.normal(next(keys), (cout,), jnp.float32))
        b = (b / np.sqrt(fan)).astype(np.float32)
        wm, wt = _split_weight(w, d["G"])
        params[d["name"]] = {"wm": wm, "wt": wt,
                             "b": jnp.asarray(b.reshape(cout, 1), jnp.float32)}
        raw[d["name"]] = {"w": jnp.asarray(w), "b": jnp.asarray(b)}

    # convw / convp: 1x1, bias-free, no spectral norm (hoisted out of the kernel)
    for name, cin in (("convw", N_WIRES), ("convp", N_FEATURES)):
        w = np.asarray(jax.random.normal(next(keys), (ndf, cin, 1), jnp.float32))
        w = (w / np.sqrt(cin)).astype(np.float32)
        params[name + "_w"] = jnp.asarray(w[:, :, 0])            # (ndf, cin) f32
        raw[name] = {"w": jnp.asarray(w), "b": jnp.zeros((ndf,), jnp.float32)}

    dlin = ndf * 6 * seq_len
    lw = np.asarray(jax.random.normal(next(keys), (1, dlin), jnp.float32))
    lw = (lw / np.sqrt(dlin)).astype(np.float32)
    lb = (np.asarray(jax.random.normal(next(keys), (1, 1), jnp.float32)) * 0.01
          ).astype(np.float32)
    # PyTorch flattens (B, C, L) as c*L + t  ->  store the weight as (C, L).
    params["lin0_w"] = jnp.asarray(lw.reshape(ndf * 6, seq_len))
    params["lin0_b"] = jnp.asarray(lb)
    raw["lin0_w"] = jnp.asarray(lw)
    raw["lin0_b"] = jnp.asarray(lb)
    return params, raw


# ----------------------------------------------------------------------------
# Pure-JAX reference (for the runtime cross-check only)
# ----------------------------------------------------------------------------
def reference_forward(raw, p_in, w_in):
    """Mirror of Disc.forward in plain JAX.  Circular-conv inputs/weights are
    bf16-quantized like the kernel's MXU operands (f32 accumulation); the first
    1x1 projections stay f32 like the hoisted einsums."""
    q = lambda a: a.astype(jnp.bfloat16).astype(jnp.float32)

    def conv(x, name, res=None, act=True, quant=True):
        w, b = raw[name]["w"], raw[name]["b"]
        k = w.shape[-1]
        pad = (k - 1) // 2
        xq = q(x) if quant else x
        wq = q(w) if quant else w
        if pad:
            L = xq.shape[-1]
            xq = jnp.concatenate([xq[..., L - pad:], xq, xq[..., :pad]], axis=-1)
        y = lax.conv_general_dilated(
            xq, wq, window_strides=(1,), padding="VALID",
            dimension_numbers=("NCH", "OIH", "NCH"),
            precision=lax.Precision.HIGHEST)
        y = y + b[None, :, None]
        if res is not None:
            y = y + res
        if act:
            y = jnp.where(y >= 0, y, LEAKY_SLOPE * y)
        return y

    w = conv(w_in, "convw", act=False, quant=False)
    w0 = conv(w, "convw0")
    w1 = conv(w0, "convw1")
    w2 = conv(w1, "convw2", res=w0)
    w3 = conv(w2, "convw3")
    w4 = conv(w3, "convw4", res=w2)
    p = conv(p_in, "convp", act=False, quant=False)
    p0 = conv(p, "convp0")
    p1 = conv(p0, "convp1")
    p2 = conv(p1, "convp2", res=p0)
    p3 = conv(p2, "convp3")
    x = jnp.concatenate([p3, w4], axis=1)
    x1 = conv(x, "conv1")
    x2 = conv(x1, "conv2", res=x)
    x3 = conv(x2, "conv3")
    x4 = conv(x3, "conv4", res=x2)
    x5 = conv(x4, "conv5")
    flat = x5.reshape(x5.shape[0], -1)
    out = jnp.dot(flat, raw["lin0_w"].T, precision=lax.Precision.HIGHEST)
    return (out + raw["lin0_b"])[:, 0]


# ----------------------------------------------------------------------------
# Demo / self-check
# ----------------------------------------------------------------------------
if __name__ == "__main__":
    ndf, seq_len, batch = 8, 256, 2       # batch even: both v7x TCs get work
    assert seq_len >= 256                 # circular pad (max 256) must be <= L

    roll_like_jnp = detect_roll_convention()   # before any jit; passed explicitly

    defs = make_layer_defs(ndf)
    key = jax.random.PRNGKey(0)
    kp, kw, kparams = jax.random.split(key, 3)
    params, raw = init_params(kparams, defs, ndf, seq_len)

    p_in = jax.random.normal(kp, (batch, N_FEATURES, seq_len), jnp.float32)
    w_in = jax.random.normal(kw, (batch, N_WIRES, seq_len), jnp.float32)

    fwd = jax.jit(functools.partial(disc_forward, defs, ndf, roll_like_jnp))
    out = fwd(params, p_in, w_in)
    jax.block_until_ready(out)
    assert out.shape == (batch,)
    assert bool(jnp.all(jnp.isfinite(out)))

    # Cross-check the fused Pallas kernel against the pure-JAX reference.
    ref = jax.jit(functools.partial(reference_forward, raw))(p_in, w_in)
    jax.block_until_ready(ref)
    np.testing.assert_allclose(np.asarray(out), np.asarray(ref),
                               rtol=2e-2, atol=1e-3)

    print("KERNEL_OK")
</pallas_src>

<mosaic_0001>
module attributes {stable_mosaic.version = 11 : i64} {
  func.func @probe(%arg0: memref<8x128xf32, #tpu.memory_space<vmem>>, %arg1: memref<8x128xf32, #tpu.memory_space<vmem>>) attributes {dimension_semantics = [], scalar_prefetch = 0 : i64, scratch_operands = 0 : i64, tpu.core_type = #tpu.core_type<tc>} {
    %c0 = arith.constant 0 : index
    %c0_0 = arith.constant 0 : index
    %0 = vector.load %arg0[%c0, %c0_0] : memref<8x128xf32, #tpu.memory_space<vmem>>, vector<8x128xf32>
    %c3_i32 = arith.constant 3 : i32
    %1 = tpu.dynamic_rotate %0 by %c3_i32 dim 1 : vector<8x128xf32>, i32 -> vector<8x128xf32>
    %c0_1 = arith.constant 0 : index
    %c0_2 = arith.constant 0 : index
    %2 = vector.load %arg1[%c0_1, %c0_2] : memref<8x128xf32, #tpu.memory_space<vmem>>, vector<8x128xf32>
    tpu.vector_store %arg1[%c0_1, %c0_2], %1 {strides = array<i32>} : memref<8x128xf32, #tpu.memory_space<vmem>>, vector<8x128xf32>,
    return
  }
}

</mosaic_0001>

<llo_original>
// kernel: tpu_custom_call.1
$region0: #{tpu_custom_call.1}
  #allocation0 [shape = 'u32[]', space=smem, size = 0x4, offset = 0x4, fixed_abs, tag = 'smem constant byte address 0x4 - core index']
  #allocation1 [shape = 'u32[144,128]{1,0:T(1,128)}', space=vmem, size = 0x12000, scoped, tag = 'internal scratch']
  %s0 = inlined_call_operand.hbm [shape: f32[8,128], index: 0, kind: input, shape index: {}]
  %s1 = inlined_call_operand.hbm [shape: f32[8,128], index: 1, kind: output, shape index: {}]
  %s2 = sld [smem:[#allocation0]]
  $region18: #{tpu_custom_call.1} parent=0
    _
  %s4 = ssub.s32 1, %s2
  %s5 = scalar_select 0, %s4, %s2
  $region1: #{tpu_custom_call.1} parent=0
    #allocation2 [shape = 'u8[4096]{0}', space=vmem, size = 0x1000, scoped, tag = 'input window, operand 0, single buffered']
    #allocation3 [shape = 's32[1]{0}', space=sflag, size = 0x4, scoped, tag = 'scoped memory for tpu_custom_call.1']
    #allocation4 [shape = 's32[1]{0}', space=sflag, size = 0x4, scoped, tag = 'scoped memory for tpu_custom_call.1']
    #allocation5 [shape = 'u8[4096]{0}', space=vmem, size = 0x1000, scoped, tag = 'output window, operand 0, single buffered']
    %6 = vsyncpa [#allocation3], 0
    %7 = vsyncpa [#allocation4], 0
    // Predicated region
    $region2: #{tpu_custom_call.1} parent=1 // pred_check
      _
    $region3: #{tpu_custom_call.1} parent=1 // pred_check_branch
      %9 = sbr.rel (0) target = $region5
    $region4: #{tpu_custom_call.1} parent=1 // pred_region
      %s11 = ssub.s32 128, 128
      %12 = vsyncadd [#allocation3], %s11
      %s14 = sshll.u32 [#allocation2], 4
      %s15 = int_to_ptr.vmem [resolvable:$true] %s14
      %17 = dma.hbm_to_vmem [thread:$0]  %s0, 128, %s15, [#allocation3]
    $region5: #{tpu_custom_call.1} parent=1 // pred_fallthru
      _
    // Predicated region
    $region6: #{tpu_custom_call.1} parent=1 // pred_check
      _
    $region7: #{tpu_custom_call.1} parent=1 // pred_check_branch
      %19 = sbr.rel (0) target = $region9
    $region8: #{tpu_custom_call.1} parent=1 // pred_region
      %20 = dma.done [#allocation3], 128
    $region9: #{tpu_custom_call.1} parent=1 // pred_fallthru
      _
    %v21 = vld [vmem:[#allocation2] sm:$0xff]
    %22 = vrot.lane.b32.xlu0 %v21, 3
    %v23 = vpop.permute.xlu0 %22
    %24 = vst [vmem:[#allocation5] sm:$0xff] %v23
    // Predicated region
    $region10: #{tpu_custom_call.1} parent=1 // pred_check
      _
    $region11: #{tpu_custom_call.1} parent=1 // pred_check_branch
      %26 = sbr.rel (0) target = $region13
    $region12: #{tpu_custom_call.1} parent=1 // pred_region
      %s28 = ssub.s32 128, 128
      %29 = vsyncadd [#allocation4], %s28
      %s31 = sshll.u32 [#allocation5], 4
      %s32 = int_to_ptr.vmem [resolvable:$true] %s31
      %34 = dma.vmem_to_hbm [thread:$0]  %s32, 128, %s1, [#allocation4]
    $region13: #{tpu_custom_call.1} parent=1 // pred_fallthru
      _
    // Predicated region
    $region14: #{tpu_custom_call.1} parent=1 // pred_check
      _
    $region15: #{tpu_custom_call.1} parent=1 // pred_check_branch
      %36 = sbr.rel (0) target = $region17
    $region16: #{tpu_custom_call.1} parent=1 // pred_region
      %37 = dma.done [#allocation4], 128
    $region17: #{tpu_custom_call.1} parent=1 // pred_fallthru
      _
    %38 = vsyncpa [#allocation3], 1
    %39 = vsyncpa [#allocation4], 1

</llo_original>
